<compile_context>
chip_gen: v7x
topology: tpu7x:2x2x1
jax: 0.10.0
libtpu: 0.0.40
codegen_flags: <defaults>
</compile_context>

<pallas_src>
import jax
import jax.numpy as jnp
from jax import lax
from jax.experimental import pallas as pl
from jax.experimental.pallas import tpu as pltpu


# ---------------------------------------------------------------------------
# VMEM-aware tiling policy
# ---------------------------------------------------------------------------
def _round_up(v, m):
    return ((v + m - 1) // m) * m


def _hw_vmem_bytes():
    """Physical VMEM per core (generation-aware); conservative fallback."""
    try:
        info = pltpu.get_tpu_info()
        cap = int(getattr(info, "vmem_capacity_bytes", 0) or 0)
        if cap > 0:
            return cap
    except Exception:
        pass
    return 64 << 20  # v7x worst case: be conservative when unknown


def _per_block_budget_bytes(cap):
    # 2 streams (x in, out) x 2 pipeline buffers must stay well under physical
    # VMEM: v5e/v6e (128 MiB) -> 8 MiB blocks, v7x (64 MiB) -> 4 MiB blocks.
    return max(1 << 20, min(8 << 20, cap // 16))


def _vmem_limit_bytes(tile_b, tile_f, itemsize, cap):
    # Explicit scoped-VMEM limit (defaults: 16 MiB v5e / 32 MiB v6e,v7x):
    # double-buffered in + out blocks at >=f32 width, plus slack for the tiny
    # (1|2, tile_f) side streams, kernel temps and compiler scratch.
    need = 2 * 2 * tile_b * tile_f * max(itemsize, 4) + (4 << 20)
    return int(min(max(32 << 20, 2 * need), int(cap * 0.7)))


def _choose_tiles(B, F, itemsize, budget_bytes):
    """Pick (tile_b, tile_f) for (B, F) blocks.

    * Lane (feature) tile: full F when F <= 128, otherwise a multiple of 128;
      grids use cdiv so the tail block is write-masked (F need not divide).
    * Sublane (batch) tile: the whole batch when it fits the per-block budget
      (enables the fused single-pass training kernel), otherwise a multiple of
      8 (two-pass training / batch-tiled eval).
    * Guarantees >= 2 grid steps whenever F allows it so a v7x megacore can
      shard the feature axis across both TensorCores (no effect on v5e/v6e).
    """
    budget_elems = max(budget_bytes // max(itemsize, 1), 8 * 128)
    f128 = _round_up(F, 128)

    min_tile_f = F if F <= 128 else 128
    if B * min_tile_f <= budget_elems:
        # Whole batch resident in one block.
        tile_b = B
        if F <= 128:
            tile_f = F
        else:
            tile_f = min(f128, 2048, max(128, (budget_elems // B) // 128 * 128))
    else:
        # Large batch: tile the sublane axis too (two-pass training path).
        tile_f = F if F <= 128 else min(512, f128)
        tile_b = max(8, (budget_elems // tile_f) // 8 * 8)
        if tile_b >= B:
            tile_b = B

    # v7x megacore: never leave a single-block grid if F can be split.
    if pl.cdiv(F, tile_f) * pl.cdiv(B, tile_b) == 1 and F > 128:
        tile_f = max(128, _round_up(pl.cdiv(F, 2), 128))
    # TODO(synk): when F <= 128 and the whole problem is one block, split the
    # batch axis instead so v7x still engages both TensorCores.
    return tile_b, tile_f


# ---------------------------------------------------------------------------
# Kernels (native (B, F) layout: batch on sublanes, features on lanes)
#
# Algebra (exact rewrite, no inverse trig in-kernel):
#   ang = acos(2x - 1) in [0, pi]
#   cos(ang + r) = (2x - 1) * cos(r) - 2 * sqrt(x - x^2) * sin(r)
#   out = (cos(ang + r) + 1) / 2
#       = x * cos(r) - sqrt(max(x - x^2, 0)) * sin(r) + 0.5 * (1 - cos(r))
# training: r = -acos(2*max_b(x) - 1)  =>  cos(r) = 2*max_b(x) - 1,
#           sin(r) = -2*sqrt(max_b(x) - max_b(x)^2)
# ---------------------------------------------------------------------------
def _qc_norm_train_fused_kernel(x_ref, out_ref, maxc_ref):
    """Single pass: whole batch resident -> per-feature max + rotation in one go."""
    # TODO(synk): keep the elementwise chain in bf16 on v6e/v7x (bf16 VALU);
    # f32 compute is kept so the same kernel stays correct on v5e.
    x = x_ref[...].astype(jnp.float32)                        # (B, tile_f)
    mx = jnp.max(x, axis=0, keepdims=True)                    # (1, tile_f)
    m = 2.0 * mx - 1.0                                        # cos(min angle)
    two_sm = 2.0 * jnp.sqrt(jnp.maximum(mx - mx * mx, 0.0))   # sin(min angle)
    h = jnp.sqrt(jnp.maximum(x - x * x, 0.0))                 # 0.5*sin(acos(2x-1))
    out_ref[...] = (x * m + h * two_sm + 0.5 * (1.0 - m)).astype(out_ref.dtype)
    maxc_ref[...] = mx


def _make_batch_max_kernel(B_total, tile_b, needs_mask):
    """Pass 1 of the large-batch path: per-feature max over the batch axis."""

    def kernel(x_ref, maxc_ref):
        bi = pl.program_id(1)
        x = x_ref[...].astype(jnp.float32)                    # (tile_b, tile_f)
        if needs_mask:  # padded rows of the batch tail block must not win the max
            row = lax.broadcasted_iota(jnp.int32, x.shape, 0) + bi * tile_b
            x = jnp.where(row < B_total, x, -jnp.inf)
        blk_max = jnp.max(x, axis=0, keepdims=True)

        @pl.when(bi == 0)
        def _():
            maxc_ref[...] = blk_max

        @pl.when(bi != 0)
        def _():
            maxc_ref[...] = jnp.maximum(maxc_ref[...], blk_max)

    return kernel


def _qc_apply_rotation_kernel(x_ref, coef_ref, out_ref):
    """Elementwise rotation: coef = [cos(r); sin(r)] per feature, shape (2, tile_f)."""
    x = x_ref[...].astype(jnp.float32)                        # (tile_b, tile_f)
    c = coef_ref[0:1, :]
    s = coef_ref[1:2, :]
    h = jnp.sqrt(jnp.maximum(x - x * x, 0.0))
    out_ref[...] = (x * c - h * s + 0.5 * (1.0 - c)).astype(out_ref.dtype)


# ---------------------------------------------------------------------------
# pallas_call wrappers
# ---------------------------------------------------------------------------
def _qc_norm_train_fused(x, tile_f, vmem_limit):
    B, F = x.shape
    nf = pl.cdiv(F, tile_f)
    return pl.pallas_call(
        _qc_norm_train_fused_kernel,
        out_shape=(
            jax.ShapeDtypeStruct((B, F), x.dtype),
            jax.ShapeDtypeStruct((1, F), jnp.float32),
        ),
        grid=(nf,),
        in_specs=[pl.BlockSpec((B, tile_f), lambda i: (0, i))],
        out_specs=(
            pl.BlockSpec((B, tile_f), lambda i: (0, i)),
            pl.BlockSpec((1, tile_f), lambda i: (0, i)),
        ),
        compiler_params=pltpu.CompilerParams(
            dimension_semantics=("parallel",), vmem_limit_bytes=vmem_limit
        ),
    )(x)


def _qc_batch_max(x, tile_b, tile_f, vmem_limit):
    B, F = x.shape
    nf, nb = pl.cdiv(F, tile_f), pl.cdiv(B, tile_b)
    kernel = _make_batch_max_kernel(B, tile_b, needs_mask=(B % tile_b != 0))
    return pl.pallas_call(
        kernel,
        out_shape=jax.ShapeDtypeStruct((1, F), jnp.float32),
        # reduction (batch) axis innermost; the maxc block stays resident over it
        grid=(nf, nb),
        in_specs=[pl.BlockSpec((tile_b, tile_f), lambda fi, bi: (bi, fi))],
        out_specs=pl.BlockSpec((1, tile_f), lambda fi, bi: (0, fi)),
        compiler_params=pltpu.CompilerParams(
            dimension_semantics=("parallel", "arbitrary"), vmem_limit_bytes=vmem_limit
        ),
    )(x)


def _qc_apply_rotation(x, coef, tile_b, tile_f, vmem_limit):
    B, F = x.shape
    nf, nb = pl.cdiv(F, tile_f), pl.cdiv(B, tile_b)
    return pl.pallas_call(
        _qc_apply_rotation_kernel,
        out_shape=jax.ShapeDtypeStruct((B, F), x.dtype),
        # Feature tile is the outer grid axis: the tiny coef block index only
        # depends on fi, so it stays VMEM-resident across all batch steps.
        grid=(nf, nb),
        in_specs=[
            pl.BlockSpec((tile_b, tile_f), lambda fi, bi: (bi, fi)),
            pl.BlockSpec((2, tile_f), lambda fi, bi: (0, fi)),
        ],
        out_specs=pl.BlockSpec((tile_b, tile_f), lambda fi, bi: (bi, fi)),
        compiler_params=pltpu.CompilerParams(
            dimension_semantics=("parallel", "parallel"), vmem_limit_bytes=vmem_limit
        ),
        # TODO(synk): bump x's pipeline_mode to pl.Buffered(3) only if an xprof
        # trace shows exposed DMA at the chosen tile size.
    )(x, coef)


def _qc_norm_train_two_pass(x, tile_b, tile_f, vmem_limit):
    """Large-batch training: (1) batch-max reduction, (2) elementwise rotation.

    Costs 1.5x the HBM reads of x but keeps blocks VMEM-sized and fully
    pipelined (required on v7x's 64 MiB VMEM)."""
    maxc = _qc_batch_max(x, tile_b, tile_f, vmem_limit)            # (1, F)
    m = 2.0 * maxc - 1.0
    s = -2.0 * jnp.sqrt(jnp.maximum(maxc - maxc * maxc, 0.0))
    coef = jnp.concatenate([m, s], axis=0)                         # (2, F)
    out = _qc_apply_rotation(x, coef, tile_b, tile_f, vmem_limit)
    return out, maxc


# ---------------------------------------------------------------------------
# Module wrapper (mirrors QC_Norm_Real_Correction forward semantics)
# ---------------------------------------------------------------------------
class QCNormRealCorrection:
    def __init__(self, num_features, momentum=0.1):
        self.num_features = num_features
        self.momentum = momentum
        # same init as Parameter(torch.zeros(num_features), requires_grad=False)
        self.x_running_rot = jnp.zeros((num_features,), jnp.float32)

    def __call__(self, x, training=True):
        if not jnp.issubdtype(x.dtype, jnp.floating):
            x = x.astype(jnp.float32)
        B, F = x.shape
        cap = _hw_vmem_bytes()
        tile_b, tile_f = _choose_tiles(B, F, x.dtype.itemsize, _per_block_budget_bytes(cap))
        vmem_limit = _vmem_limit_bytes(tile_b, tile_f, x.dtype.itemsize, cap)

        if training:
            if tile_b >= B:
                out, maxc = _qc_norm_train_fused(x, tile_f, vmem_limit)
            else:
                out, maxc = _qc_norm_train_two_pass(x, tile_b, tile_f, vmem_limit)
            # Running-stat (buffer) update: F-length glue in plain JAX.
            # TODO(synk): Mosaic has no acos lowering; this stays off the (B, F)
            # hot path so it is negligible.
            m_row = 2.0 * maxc[0] - 1.0
            x_moving_rot = -jnp.arccos(jnp.clip(m_row, -1.0, 1.0))
            self.x_running_rot = (
                self.momentum * self.x_running_rot
                + (1.0 - self.momentum) * x_moving_rot
            )
        else:
            rot = self.x_running_rot.astype(jnp.float32)
            coef = jnp.stack([jnp.cos(rot), jnp.sin(rot)], axis=0)   # (2, F)
            out = _qc_apply_rotation(x, coef, tile_b, tile_f, vmem_limit)
        return out


# ---------------------------------------------------------------------------
# Pure-JAX literal reference (matches the PyTorch code line by line)
# ---------------------------------------------------------------------------
def reference_forward(x, running_rot, momentum, training=True):
    xT = x.T
    ang = jnp.arccos(xT * 2.0 - 1.0)
    if training:
        moving = -jnp.min(ang, axis=-1)
        new_running = momentum * running_rot + (1.0 - momentum) * moving
        final = ang + moving[:, None]
    else:
        new_running = running_rot
        final = ang + running_rot[:, None]
    return ((jnp.cos(final) + 1.0) / 2.0).T, new_running


if __name__ == "__main__":
    key = jax.random.PRNGKey(0)

    # --- canonical small shapes (B=8, F=256): fused train + batched eval ---
    B, F = 8, 256
    x = jax.random.uniform(key, (B, F), dtype=jnp.float32, minval=0.02, maxval=0.98)
    mod = QCNormRealCorrection(num_features=F, momentum=0.1)

    y_train = jax.block_until_ready(mod(x, training=True))
    y_eval = jax.block_until_ready(mod(x, training=False))

    ref_train, ref_running = reference_forward(
        x, jnp.zeros((F,), jnp.float32), 0.1, training=True
    )
    ref_eval, _ = reference_forward(x, ref_running, 0.1, training=False)

    assert y_train.shape == (B, F) and y_train.dtype == jnp.float32
    assert y_eval.shape == (B, F) and y_eval.dtype == jnp.float32
    assert jnp.allclose(y_train, ref_train, atol=1e-4, rtol=1e-4)
    assert jnp.allclose(mod.x_running_rot, ref_running, atol=1e-4, rtol=1e-4)
    assert jnp.allclose(y_eval, ref_eval, atol=1e-4, rtol=1e-4)

    # --- awkward shapes (B=20, F=200): cdiv tail masking on both axes ---
    B2, F2 = 20, 200
    x2 = jax.random.uniform(
        jax.random.PRNGKey(0), (B2, F2), dtype=jnp.float32, minval=0.02, maxval=0.98
    )
    mod2 = QCNormRealCorrection(num_features=F2, momentum=0.1)
    y2_train = jax.block_until_ready(mod2(x2, training=True))
    y2_eval = jax.block_until_ready(mod2(x2, training=False))
    ref2_train, ref2_running = reference_forward(
        x2, jnp.zeros((F2,), jnp.float32), 0.1, training=True
    )
    ref2_eval, _ = reference_forward(x2, ref2_running, 0.1, training=False)
    assert jnp.allclose(y2_train, ref2_train, atol=1e-4, rtol=1e-4)
    assert jnp.allclose(mod2.x_running_rot, ref2_running, atol=1e-4, rtol=1e-4)
    assert jnp.allclose(y2_eval, ref2_eval, atol=1e-4, rtol=1e-4)

    # --- force the large-batch two-pass path (batch tail mask + coef reuse) ---
    cap = _hw_vmem_bytes()
    vl = _vmem_limit_bytes(8, 128, 4, cap)
    y2_two_pass, _ = _qc_norm_train_two_pass(x2, tile_b=8, tile_f=128, vmem_limit=vl)
    y2_two_pass = jax.block_until_ready(y2_two_pass)
    assert jnp.allclose(y2_two_pass, ref2_train, atol=1e-4, rtol=1e-4)

    print("KERNEL_OK")
</pallas_src>

<mosaic_0001>
module attributes {stable_mosaic.version = 11 : i64} {
  func.func @_qc_norm_train_fused_kernel(%arg0: i32, %arg1: memref<8x128xf32, #tpu.memory_space<vmem>>, %arg2: memref<8x128xf32, #tpu.memory_space<vmem>>, %arg3: memref<1x128xf32, #tpu.memory_space<vmem>>) attributes {dimension_semantics = [#tpu.dimension_semantics<parallel>], iteration_bounds = array<i64: 2>, scalar_prefetch = 0 : i64, scratch_operands = 0 : i64, tpu.core_type = #tpu.core_type<tc>, window_params = [{transform_indices = @transform_0, window_bounds = array<i64: 8, 128>}, {transform_indices = @transform_1, window_bounds = array<i64: 8, 128>}, {transform_indices = @transform_2, window_bounds = array<i64: 1, 128>}]} {
    %c0 = arith.constant 0 : index
    %c0_0 = arith.constant 0 : index
    %0 = vector.load %arg1[%c0, %c0_0] : memref<8x128xf32, #tpu.memory_space<vmem>>, vector<8x128xf32>
    %cst = arith.constant dense<0xFF800000> : vector<128xf32>
    %1 = vector.multi_reduction <maximumf>, %0, %cst [0] : vector<8x128xf32> to vector<128xf32>
    %2 = vector.shape_cast %1 : vector<128xf32> to vector<1x128xf32>
    %cst_1 = arith.constant 2.000000e+00 : f32
    %3 = vector.broadcast %cst_1 : f32 to vector<1x128xf32>
    %4 = arith.mulf %3, %2 : vector<1x128xf32>
    %cst_2 = arith.constant 1.000000e+00 : f32
    %5 = vector.broadcast %cst_2 : f32 to vector<1x128xf32>
    %6 = arith.subf %4, %5 : vector<1x128xf32>
    %7 = arith.mulf %2, %2 : vector<1x128xf32>
    %8 = arith.subf %2, %7 : vector<1x128xf32>
    %cst_3 = arith.constant 0.000000e+00 : f32
    %9 = vector.broadcast %cst_3 : f32 to vector<1x128xf32>
    %10 = arith.maximumf %8, %9 : vector<1x128xf32>
    %11 = math.sqrt %10 : vector<1x128xf32>
    %cst_4 = arith.constant 2.000000e+00 : f32
    %12 = vector.broadcast %cst_4 : f32 to vector<1x128xf32>
    %13 = arith.mulf %12, %11 : vector<1x128xf32>
    %14 = arith.mulf %0, %0 : vector<8x128xf32>
    %15 = arith.subf %0, %14 : vector<8x128xf32>
    %cst_5 = arith.constant 0.000000e+00 : f32
    %16 = vector.broadcast %cst_5 : f32 to vector<8x128xf32>
    %17 = arith.maximumf %15, %16 : vector<8x128xf32>
    %18 = math.sqrt %17 : vector<8x128xf32>
    %19 = vector.broadcast %6 : vector<1x128xf32> to vector<8x128xf32>
    %20 = arith.mulf %0, %19 : vector<8x128xf32>
    %21 = vector.broadcast %13 : vector<1x128xf32> to vector<8x128xf32>
    %22 = arith.mulf %18, %21 : vector<8x128xf32>
    %23 = arith.addf %20, %22 : vector<8x128xf32>
    %cst_6 = arith.constant 1.000000e+00 : f32
    %24 = vector.broadcast %cst_6 : f32 to vector<1x128xf32>
    %25 = arith.subf %24, %6 : vector<1x128xf32>
    %cst_7 = arith.constant 5.000000e-01 : f32
    %26 = vector.broadcast %cst_7 : f32 to vector<1x128xf32>
    %27 = arith.mulf %26, %25 : vector<1x128xf32>
    %28 = vector.broadcast %27 : vector<1x128xf32> to vector<8x128xf32>
    %29 = arith.addf %23, %28 : vector<8x128xf32>
    %c0_8 = arith.constant 0 : index
    %c0_9 = arith.constant 0 : index
    %30 = vector.load %arg2[%c0_8, %c0_9] : memref<8x128xf32, #tpu.memory_space<vmem>>, vector<8x128xf32>
    tpu.vector_store %arg2[%c0_8, %c0_9], %29 {strides = array<i32>} : memref<8x128xf32, #tpu.memory_space<vmem>>, vector<8x128xf32>,
    %c0_10 = arith.constant 0 : index
    %c0_11 = arith.constant 0 : index
    %31 = vector.load %arg3[%c0_10, %c0_11] : memref<1x128xf32, #tpu.memory_space<vmem>>, vector<1x128xf32>
    tpu.vector_store %arg3[%c0_10, %c0_11], %2 {strides = array<i32>} : memref<1x128xf32, #tpu.memory_space<vmem>>, vector<1x128xf32>,
    return
  }
  func.func @transform_0(%arg0: i32) -> (i32, i32) {
    %c0_i32 = arith.constant 0 : i32
    %c0_i32_0 = arith.constant 0 : i32
    return %c0_i32, %arg0 : i32, i32
  }
  func.func @transform_1(%arg0: i32) -> (i32, i32) {
    %c0_i32 = arith.constant 0 : i32
    %c0_i32_0 = arith.constant 0 : i32
    return %c0_i32, %arg0 : i32, i32
  }
  func.func @transform_2(%arg0: i32) -> (i32, i32) {
    %c0_i32 = arith.constant 0 : i32
    %c0_i32_0 = arith.constant 0 : i32
    return %c0_i32, %arg0 : i32, i32
  }
}

</mosaic_0001>

<llo_original>
// kernel: tpu_custom_call.1
$region0: #{tpu_custom_call.1}
  #allocation0 [shape = 'u32[]', space=smem, size = 0x4, offset = 0x4, fixed_abs, tag = 'smem constant byte address 0x4 - core index']
  #allocation1 [shape = 'u32[144,128]{1,0:T(1,128)}', space=vmem, size = 0x12000, scoped, tag = 'internal scratch']
  %s0 = inlined_call_operand.hbm [shape: f32[8,256], index: 0, kind: input, shape index: {}]
  %s1 = inlined_call_operand.hbm [shape: f32[8,256], index: 1, kind: output, shape index: {0}]
  %s2 = inlined_call_operand.hbm [shape: f32[1,256], index: 2, kind: output, shape index: {1}]
  %3 = xla_tuple %s1, %s2
  %s4 = sld [smem:[#allocation0]]
  $region49: #{tpu_custom_call.1} parent=0
    _
  %s6 = ssub.s32 1, %s4
  %s7 = scalar_select 0, %s6, %s4
  $region1: #{tpu_custom_call.1} parent=0
    #allocation2 [shape = 'u8[8192]{0}', space=vmem, size = 0x2000, scoped, tag = 'input window, operand 0']
    #allocation3 [shape = 's32[2]{0}', space=sflag, size = 0x8, scoped, tag = 'scoped memory for tpu_custom_call.1']
    #allocation4 [shape = 's32[2]{0}', space=sflag, size = 0x8, scoped, tag = 'scoped memory for tpu_custom_call.1']
    #allocation5 [shape = 'u8[8192]{0}', space=vmem, size = 0x2000, scoped, tag = 'output window, operand 0']
    #allocation6 [shape = 'u8[1024]{0}', space=vmem, size = 0x400, scoped, tag = 'output window, operand 1']
    #allocation7 [shape = 's32[2]{0}', space=sflag, size = 0x8, scoped, tag = 'scoped memory for tpu_custom_call.1']
    %8 = vsyncpa [#allocation3], 0
    %s9 = scalar_lea.sflag [#allocation3], 1
    %10 = vsyncpa %s9, 0
    %11 = vsyncpa [#allocation4], 0
    %s12 = scalar_lea.sflag [#allocation4], 1
    %13 = vsyncpa %s12, 0
    %14 = vsyncpa [#allocation7], 0
    %s15 = scalar_lea.sflag [#allocation7], 1
    %16 = vsyncpa %s15, 0
    loop: start=0, step=1, limit=4
    $region2: #{tpu_custom_call.1} parent=1 // loop_pre_header
      _
    $region3: #{tpu_custom_call.1} parent=1 // loop_header
      %s18 = sphi 0, %s22
      %p19 = scmp.ge.s32.totalorder %s18, 4
      %s28 = sphi 0, %s30
      %s31 = sphi 0, %s28
      %s32 = sphi 0, %s31
      %s48 = sphi 0, %s32
      %s54 = sphi 0, %s56
      %s57 = sphi 0, %s54
      %s58 = sphi 0, %s57
      %s74 = sphi 0, %s58
      %s80 = sphi 0, %s82
      %s83 = sphi 0, %s80
      %s84 = sphi 0, %s83
      %s100 = sphi 0, %s84
    $region4: #{tpu_custom_call.1} parent=1 // loop_header_branch
      %21 = sbr.rel (%p19) target = $region8
    $region5: #{tpu_custom_call.1} parent=1 // loop_body
      %s23 = ssub.s32 %s18, 1
      %s24 = ssub.s32 %s18, 2
      %s25 = sadd.s32 %s18, 1
      %s26 = ssub.s32 %s18, %s25
      %p27 = scmp.eq.s32.totalorder %s26, 0
      %s29 = sadd.s32 %s28, 1
      %s30 = scalar_select %p27, %s28, %s29
      %p33 = pneg %p27
      %p34 = scmp.eq.s32.totalorder %s18, 1
      %p35 = por %p33, %p34
      %p36 = scmp.ne.s32.totalorder %s28, %s31
      %p37 = scmp.eq.s32.totalorder %s18, 0
      %p38 = por %p36, %p37
      %p39 = scmp.ne.s32.totalorder %s28, %s31
      %p40 = scmp.eq.s32.totalorder %s23, 1
      %p41 = por %p39, %p40
      %p42 = scmp.ne.s32.totalorder %s31, %s32
      %p43 = scmp.eq.s32.totalorder %s23, 0
      %p44 = por %p42, %p43
      %p45 = scmp.ne.s32.totalorder %s31, %s32
      %p46 = scmp.eq.s32.totalorder %s24, 1
      %p47 = por %p45, %p46
      %p49 = scmp.ne.s32.totalorder %s32, %s48
      %p50 = scmp.eq.s32.totalorder %s24, 0
      %p51 = por %p49, %p50
      %s52 = ssub.s32 %s18, %s25
      %p53 = scmp.eq.s32.totalorder %s52, 0
      %s55 = sadd.s32 %s54, 1
      %s56 = scalar_select %p53, %s54, %s55
      %p59 = pneg %p53
      %p60 = scmp.eq.s32.totalorder %s18, 1
      %p61 = por %p59, %p60
      %p62 = scmp.ne.s32.totalorder %s54, %s57
      %p63 = scmp.eq.s32.totalorder %s18, 0
      %p64 = por %p62, %p63
      %p65 = scmp.ne.s32.totalorder %s54, %s57
      %p66 = scmp.eq.s32.totalorder %s23, 1
      %p67 = por %p65, %p66
      %p68 = scmp.ne.s32.totalorder %s57, %s58
      %p69 = scmp.eq.s32.totalorder %s23, 0
      %p70 = por %p68, %p69
      %p71 = scmp.ne.s32.totalorder %s57, %s58
      %p72 = scmp.eq.s32.totalorder %s24, 1
      %p73 = por %p71, %p72
      %p75 = scmp.ne.s32.totalorder %s58, %s74
      %p76 = scmp.eq.s32.totalorder %s24, 0
      %p77 = por %p75, %p76
      %s78 = ssub.s32 %s18, %s25
      %p79 = scmp.eq.s32.totalorder %s78, 0
      %s81 = sadd.s32 %s80, 1
      %s82 = scalar_select %p79, %s80, %s81
      %p85 = pneg %p79
      %p86 = scmp.eq.s32.totalorder %s18, 1
      %p87 = por %p85, %p86
      %p88 = scmp.ne.s32.totalorder %s80, %s83
      %p89 = scmp.eq.s32.totalorder %s18, 0
      %p90 = por %p88, %p89
      %p91 = scmp.ne.s32.totalorder %s80, %s83
      %p92 = scmp.eq.s32.totalorder %s23, 1
      %p93 = por %p91, %p92
      %p94 = scmp.ne.s32.totalorder %s83, %s84
      %p95 = scmp.eq.s32.totalorder %s23, 0
      %p96 = por %p94, %p95
      %p97 = scmp.ne.s32.totalorder %s83, %s84
      %p98 = scmp.eq.s32.totalorder %s24, 1
      %p99 = por %p97, %p98
      %p101 = scmp.ne.s32.totalorder %s84, %s100
      %p102 = scmp.eq.s32.totalorder %s24, 0
      %p103 = por %p101, %p102
      %p104 = scmp.le.s32.totalorder 1, %s18
      %p105 = scmp.lt.s32.totalorder %s18, 3
      %p106 = pnand %p104, %p105
      %p107 = pneg %p106
      // Predicated region
      $region9: #{tpu_custom_call.1} parent=5 // pred_check
        _
      $region10: #{tpu_custom_call.1} parent=5 // pred_check_branch
        %109 = sbr.rel (%p106) target = $region12
      $region11: #{tpu_custom_call.1} parent=5 // pred_region
        %s110 = ssub.s32 %s18, 1
      $region12: #{tpu_custom_call.1} parent=5 // pred_fallthru
        _
      %p111 = scmp.lt.s32.totalorder %s18, 2
      // Predicated region
      $region13: #{tpu_custom_call.1} parent=5 // pred_check
        %p112 = pneg %p111
      $region14: #{tpu_custom_call.1} parent=5 // pred_check_branch
        %114 = sbr.rel (%p112) target = $region16
      $region15: #{tpu_custom_call.1} parent=5 // pred_region
        // Predicated region
        $region17: #{tpu_custom_call.1} parent=15 // pred_check
          %p115 = pneg %p38
        $region18: #{tpu_custom_call.1} parent=15 // pred_check_branch
          %117 = sbr.rel (%p115) target = $region20
        $region19: #{tpu_custom_call.1} parent=15 // pred_region
          %s118 = sand.u32 %s28, 1
          %s119 = scalar_lea.sflag [#allocation3], %s118
          %s120 = sand.u32 %s28, 1
          %s121 = smul.addr %s120, 8
          %s122 = scalar_lea.vmem [#allocation2], %s121
          %s124 = ssub.s32 128, 128
          %125 = vsyncadd %s119, %s124
          %s126 = smul.addr %s18, 128
          %s127 = scalar_lea.hbm %s0, %s126
          %s129 = sshll.u32 %s122, 4
          %s130 = int_to_ptr.vmem [resolvable:$true] %s129
          %132 = dma.hbm_to_vmem [thread:$0]  %s127, 128, %s130, %s119
        $region20: #{tpu_custom_call.1} parent=15 // pred_fallthru
          _
      $region16: #{tpu_custom_call.1} parent=5 // pred_fallthru
        _
      %p133 = scmp.le.s32.totalorder 1, %s18
      %p134 = scmp.lt.s32.totalorder %s18, 3
      %p135 = pnand %p133, %p134
      %p136 = pneg %p135
      // Predicated region
      $region21: #{tpu_custom_call.1} parent=5 // pred_check
        _
      $region22: #{tpu_custom_call.1} parent=5 // pred_check_branch
        %138 = sbr.rel (%p135) target = $region24
      $region23: #{tpu_custom_call.1} parent=5 // pred_region
        %s139 = ssub.s32 %s18, 1
        %s140 = sand.u32 %s31, 1
        %s141 = scalar_lea.sflag [#allocation3], %s140
        %s142 = sand.u32 %s31, 1
        %s143 = smul.addr %s142, 8
        %s144 = scalar_lea.vmem [#allocation2], %s143
        // Predicated region
        $region25: #{tpu_custom_call.1} parent=23 // pred_check
          %p145 = pneg %p44
        $region26: #{tpu_custom_call.1} parent=23 // pred_check_branch
          %147 = sbr.rel (%p145) target = $region28
        $region27: #{tpu_custom_call.1} parent=23 // pred_region
          %148 = dma.done %s141, 128
        $region28: #{tpu_custom_call.1} parent=23 // pred_fallthru
          _
        %s149 = sand.u32 %s31, 1
        %s150 = scalar_lea.sflag [#allocation3], %s149
        %s151 = sand.u32 %s31, 1
        %s152 = smul.addr %s151, 8
        %s153 = scalar_lea.vmem [#allocation2], %s152
        %p154 = pneg %p44
        %p155 = pneg %p41
        %p156 = pneg %p70
        %p157 = pneg %p67
        %s158 = sand.u32 %s57, 1
        %s159 = scalar_lea.sflag [#allocation4], %s158
        %s160 = sand.u32 %s57, 1
        %s161 = smul.addr %s160, 8
        %s162 = scalar_lea.vmem [#allocation5], %s161
        %p163 = pneg %p96
        %p164 = pneg %p93
        %s165 = sand.u32 %s83, 1
        %s166 = scalar_lea.sflag [#allocation7], %s165
        %s167 = sand.u32 %s83, 1
        %s168 = scalar_lea.vmem [#allocation6], %s167
        %v169 = vld [vmem:[%s144] sm:$0xff]
        %v170 = vrot.slane %v169, 4
        %v171 = vmax.f32 %v169, %v170
        %v172 = vrot.slane %v171, 2
        %v173 = vmax.f32 %v171, %v172
        %v174 = vrot.slane %v173, 1
        %v175 = vmax.f32 %v173, %v174
        %v176 = vmul.f32 %v175, 2.0
        %v177 = vsub.f32 %v176, 1.0
        %v178 = vmul.f32 %v175, %v175
        %v179 = vsub.f32 %v175, %v178
        %v180 = vmax.f32 %v179, 0.0
        %v181 = vrsqrt.pop %v180
        %v182 = vmul.f32 %v180, %v181
        %vm183 = vcmp.eq.f32.partialorder %v180, inf
        %v184 = vsel %vm183, %v180, %v182
        %vm185 = vcmp.eq.f32.partialorder %v180, 0.0
        %v186 = vand.u32 %v180, 2147483648
        %v187 = vsel %vm185, %v186, %v184
        %v188 = vmul.f32 %v187, 2.0
        %v189 = vmul.f32 %v169, %v169
        %v190 = vsub.f32 %v169, %v189
        %v191 = vmax.f32 %v190, 0.0
        %v192 = vrsqrt.pop %v191
        %v193 = vmul.f32 %v191, %v192
        %vm194 = vcmp.eq.f32.partialorder %v191, inf
        %v195 = vsel %vm194, %v191, %v193
        %vm196 = vcmp.eq.f32.partialorder %v191, 0.0
        %v197 = vand.u32 %v191, 2147483648
        %v198 = vsel %vm196, %v197, %v195
        %v199 = vmul.f32 %v169, %v177
        %v200 = vmul.f32 %v198, %v188
        %v201 = vadd.f32 %v199, %v200
        %v202 = vsub.f32 1.0, %v177
        %v203 = vmul.f32 %v202, 0.5
        %v204 = vadd.f32 %v201, %v203
        %205 = vst [vmem:[%s162] sm:$0xff] %v204
        %206 = vst [vmem:[%s168] sm:$0x1] %v175
        %s207 = sand.u32 %s57, 1
        %s208 = scalar_lea.sflag [#allocation4], %s207
        %s209 = sand.u32 %s57, 1
        %s210 = smul.addr %s209, 8
        %s211 = scalar_lea.vmem [#allocation5], %s210
        %s212 = sand.u32 %s83, 1
        %s213 = scalar_lea.sflag [#allocation7], %s212
        %s214 = sand.u32 %s83, 1
        %s215 = scalar_lea.vmem [#allocation6], %s214
        // Predicated region
        $region29: #{tpu_custom_call.1} parent=23 // pred_check
          %p216 = pneg %p67
        $region30: #{tpu_custom_call.1} parent=23 // pred_check_branch
          %218 = sbr.rel (%p216) target = $region32
        $region31: #{tpu_custom_call.1} parent=23 // pred_region
          %s220 = ssub.s32 128, 128
          %221 = vsyncadd %s208, %s220
          %s222 = smul.addr %s23, 128
          %s223 = scalar_lea.hbm %s1, %s222
          %s225 = sshll.u32 %s211, 4
          %s226 = int_to_ptr.vmem [resolvable:$true] %s225
          %228 = dma.vmem_to_hbm [thread:$0]  %s226, 128, %s223, %s208
        $region32: #{tpu_custom_call.1} parent=23 // pred_fallthru
          _
        // Predicated region
        $region33: #{tpu_custom_call.1} parent=23 // pred_check
          %p229 = pneg %p93
        $region34: #{tpu_custom_call.1} parent=23 // pred_check_branch
          %231 = sbr.rel (%p229) target = $region36
        $region35: #{tpu_custom_call.1} parent=23 // pred_region
          %s233 = ssub.s32 16, 16
          %234 = vsyncadd %s213, %s233
          %s235 = smul.addr %s23, 16
          %s236 = scalar_lea.hbm %s2, %s235
          %s238 = sshll.u32 %s215, 4
          %s239 = int_to_ptr.vmem [resolvable:$true] %s238
          %241 = dma.vmem_to_hbm [thread:$0]  %s239, 16, %s236, %s213
        $region36: #{tpu_custom_call.1} parent=23 // pred_fallthru
          _
      $region24: #{tpu_custom_call.1} parent=5 // pred_fallthru
        _
      %p242 = scmp.le.s32.totalorder 2, %s18
      // Predicated region
      $region37: #{tpu_custom_call.1} parent=5 // pred_check
        %p243 = pneg %p242
      $region38: #{tpu_custom_call.1} parent=5 // pred_check_branch
        %245 = sbr.rel (%p243) target = $region40
      $region39: #{tpu_custom_call.1} parent=5 // pred_region
        %s246 = ssub.s32 %s18, 2
        // Predicated region
        $region41: #{tpu_custom_call.1} parent=39 // pred_check
          %p247 = pneg %p73
        $region42: #{tpu_custom_call.1} parent=39 // pred_check_branch
          %249 = sbr.rel (%p247) target = $region44
        $region43: #{tpu_custom_call.1} parent=39 // pred_region
          %s250 = sand.u32 %s58, 1
          %s251 = scalar_lea.sflag [#allocation4], %s250
          %s252 = sand.u32 %s58, 1
          %s253 = smul.addr %s252, 8
          %s254 = scalar_lea.vmem [#allocation5], %s253
          %255 = dma.done %s251, 128
        $region44: #{tpu_custom_call.1} parent=39 // pred_fallthru
          _
        // Predicated region
        $region45: #{tpu_custom_call.1} parent=39 // pred_check
          %p256 = pneg %p99
        $region46: #{tpu_custom_call.1} parent=39 // pred_check_branch
          %258 = sbr.rel (%p256) target = $region48
        $region47: #{tpu_custom_call.1} parent=39 // pred_region
          %s259 = sand.u32 %s84, 1
          %s260 = scalar_lea.sflag [#allocation7], %s259
          %s261 = sand.u32 %s84, 1
          %s262 = scalar_lea.vmem [#allocation6], %s261
          %263 = dma.done %s260, 16
        $region48: #{tpu_custom_call.1} parent=39 // pred_fallthru
          _
      $region40: #{tpu_custom_call.1} parent=5 // pred_fallthru
        _
    $region6: #{tpu_custom_call.1} parent=1 // loop_footer
      %s22 = sadd.s32 1, %s18
    $region7: #{tpu_custom_call.1} parent=1 // loop_footer_branch
      %17 = sbr.rel target = $region3
    $region8: #{tpu_custom_call.1} parent=1 // loop_exit
      _
    %264 = vsyncpa [#allocation3], 1
    %s265 = scalar_lea.sflag [#allocation3], 1
    %266 = vsyncpa %s265, 1
    %267 = vsyncpa [#allocation4], 1
    %s268 = scalar_lea.sflag [#allocation4], 1
    %269 = vsyncpa %s268, 1
    %270 = vsyncpa [#allocation7], 1
    %s271 = scalar_lea.sflag [#allocation7], 1
    %272 = vsyncpa %s271, 1

</llo_original>
